<compile_context>
chip_gen: v5e
topology: v5e:2x2
jax: 0.10.0
libtpu: 0.0.40
codegen_flags: <defaults>
</compile_context>

<pallas_src>
import jax
import jax.numpy as jnp
from jax.experimental import pallas as pl
from jax.experimental.pallas import tpu as pltpu


def _round_up(x, m):
    return (x + m - 1) // m * m


def make_cnn_kernel(tile_n, L_pad, K_max, C_pad):
    """Fused conv(all K) + bias + ReLU + mask + maxpool + FC kernel.

    refs: x_ref   (tile_n, W_ext, D)      bf16  embedded input tile
          w_ref   (K_max, D, C_pad)       bf16  shift-stacked fused conv weight
          b_ref   (1, C_pad)              f32   fused conv bias
          mask_ref(tile_n*L_pad, C_pad)   f32   validity mask (time x column)
          fcw_ref (C_pad, CLS_pad)        bf16  fused/pre-transposed fc weight
          fcb_ref (1, CLS_pad)            f32   fc bias
          out_ref (tile_n, CLS_pad)       f32   logits (lane-dense, padded)
    """

    def kernel(x_ref, w_ref, b_ref, mask_ref, fcw_ref, fcb_ref, out_ref):
        x = x_ref[...]                       # (tile_n, W_ext, D) bf16
        w = w_ref[...]                       # (K_max, D, C_pad) bf16
        rows = tile_n * L_pad

        # Conv for ALL kernel sizes at once: accumulation of K_max shifted
        # (rows, D) @ (D, C_pad) matmuls (in-kernel im2col), f32 accumulate.
        scores = jnp.zeros((rows, C_pad), jnp.float32)
        for k in range(K_max):               # static, fully unrolled
            xk = x[:, k:k + L_pad, :].reshape(rows, -1)
            scores = scores + jnp.dot(xk, w[k],
                                      preferred_element_type=jnp.float32)

        # Bias + ReLU in f32, then zero out window positions that are invalid
        # for a given branch (l >= W - K_i + 1), the L padding rows, and the
        # padded columns.  ReLU output >= 0, so zeroing never changes the max.
        scores = jnp.maximum(scores + b_ref[...], 0.0) * mask_ref[...]

        # Max-pool over time on the lane-dense fused layout (sublane max).
        pooled = jnp.max(scores.reshape(tile_n, L_pad, C_pad), axis=1)

        # FC: the branch concat is already the column layout of `pooled`, so
        # this is a single lane-dense matmul; f32 accumulate + bias.
        logits = jnp.dot(pooled.astype(w.dtype), fcw_ref[...],
                         preferred_element_type=jnp.float32)
        # TODO(synk): dropout (self.dropout / self.dropout_embed) omitted —
        # identity in eval mode.
        out_ref[...] = logits + fcb_ref[...]

    return kernel


def cnn_forward(tokens, embed_table, conv_ws, conv_bs, fc_w, fc_b, Ks, *, tile_n=8):
    """tokens: (N, W) int32. Returns logits (N, num_classes) float32."""
    N, W = tokens.shape
    D = embed_table.shape[1]
    Co = conv_ws[0].shape[0]
    num_classes = fc_w.shape[0]

    K_max, K_min = max(Ks), min(Ks)
    L_pool = W - K_min + 1                   # most windows any branch produces
    L_pad = _round_up(L_pool, 8)             # sublane-aligned pooling length
    W_ext = L_pad + K_max - 1                # every shifted slice stays in-tile
    C_fused = len(Ks) * Co
    C_pad = _round_up(C_fused, 128)          # lane-dense conv/pool columns
    CLS_pad = _round_up(num_classes, 128)    # lane-dense output columns
    N_pad = _round_up(N, tile_n)

    # Embedding lookup (XLA gather); bf16 for the dominant MXU input stream.
    # TODO(synk): fuse the gather into the kernel (PrefetchScalarGridSpec token
    # ids + pl.Element row gather) to drop the (N, W, D) HBM round trip.
    x = jnp.take(embed_table, tokens, axis=0).astype(jnp.bfloat16)   # (N, W, D)
    x = jnp.pad(x, ((0, N_pad - N), (0, W_ext - W), (0, 0)))

    # Shift-stacked fused conv weight: w_stack[k, :, i*Co + c] = conv_ws[i][c, k, :]
    # (zero for k >= K_i and for padded columns), fused bias, and the
    # (time, column) validity mask.
    w_stack = jnp.zeros((K_max, D, C_pad), jnp.float32)
    b_fused = jnp.zeros((1, C_pad), jnp.float32)
    mask = jnp.zeros((L_pad, C_pad), jnp.float32)
    for i, K in enumerate(Ks):
        w_stack = w_stack.at[:K, :, i * Co:(i + 1) * Co].set(
            jnp.transpose(conv_ws[i], (1, 2, 0)))        # (K, D, Co)
        b_fused = b_fused.at[0, i * Co:(i + 1) * Co].set(conv_bs[i])
        mask = mask.at[:W - K + 1, i * Co:(i + 1) * Co].set(1.0)
    w_stack = w_stack.astype(jnp.bfloat16)
    mask_tiled = jnp.tile(mask, (tile_n, 1))             # (tile_n*L_pad, C_pad)

    # FC weight/bias, padded lane-dense and pre-transposed; the branch concat
    # is folded into the row layout.
    fcw = jnp.zeros((C_pad, CLS_pad), jnp.float32)
    fcw = fcw.at[:C_fused, :num_classes].set(fc_w.T).astype(jnp.bfloat16)
    fcb = jnp.zeros((1, CLS_pad), jnp.float32).at[0, :num_classes].set(fc_b)

    kernel = make_cnn_kernel(tile_n, L_pad, K_max, C_pad)
    grid = (N_pad // tile_n,)

    out = pl.pallas_call(
        kernel,
        out_shape=jax.ShapeDtypeStruct((N_pad, CLS_pad), jnp.float32),
        grid_spec=pltpu.PrefetchScalarGridSpec(
            num_scalar_prefetch=0,
            grid=grid,
            in_specs=[
                pl.BlockSpec((tile_n, W_ext, D), lambda i: (i, 0, 0)),    # x tile
                pl.BlockSpec((K_max, D, C_pad), lambda i: (0, 0, 0)),     # conv w
                pl.BlockSpec((1, C_pad), lambda i: (0, 0)),               # conv b
                pl.BlockSpec((tile_n * L_pad, C_pad), lambda i: (0, 0)),  # mask
                pl.BlockSpec((C_pad, CLS_pad), lambda i: (0, 0)),         # fc w
                pl.BlockSpec((1, CLS_pad), lambda i: (0, 0)),             # fc b
            ],
            out_specs=pl.BlockSpec((tile_n, CLS_pad), lambda i: (i, 0)),
        ),
        compiler_params=pltpu.CompilerParams(
            dimension_semantics=("parallel",),     # megacore / v7x 2-TC sharding
            vmem_limit_bytes=32 << 20),            # safe on v5e's smaller scoped VMEM
    )(x, w_stack, b_fused, mask_tiled, fcw, fcb)

    return out[:N, :num_classes]


def cnn_reference(tokens, embed_table, conv_ws, conv_bs, fc_w, fc_b, Ks):
    """Pure-JAX f32 reference mirroring the PyTorch forward (eval mode)."""
    x = jnp.take(embed_table, tokens, axis=0).astype(jnp.float32)  # (N, W, D)
    N, W, D = x.shape
    feats = []
    for K, w, b in zip(Ks, conv_ws, conv_bs):
        L = W - K + 1
        windows = jnp.stack([x[:, k:k + L, :] for k in range(K)], axis=2)  # (N,L,K,D)
        scores = jnp.einsum('nlkd,ckd->nlc', windows, w) + b[None, None, :]
        scores = jax.nn.relu(scores)
        feats.append(jnp.max(scores, axis=1))                              # (N, Co)
    feat = jnp.concatenate(feats, axis=1)
    return feat @ fc_w.T + fc_b[None, :]


if __name__ == "__main__":
    # Small config consistent with the module (narrow conv, no BN, 2 classes):
    V = 100          # embed_num
    D = 32           # embed_dim
    Co = 8           # kernel_num
    Ks = (3, 4, 5)   # kernel_sizes()
    num_classes = 2  # two_class_task
    N, W = 2, 16     # batch, sequence length

    key = jax.random.PRNGKey(0)
    k_tok, k_emb, k_fcw, k_fcb, *k_convs = jax.random.split(key, 4 + 2 * len(Ks))

    tokens = jax.random.randint(k_tok, (N, W), 0, V, dtype=jnp.int32)
    embed_table = 0.1 * jax.random.normal(k_emb, (V, D), dtype=jnp.float32)

    conv_ws, conv_bs = [], []
    for i, K in enumerate(Ks):
        kw, kb = k_convs[2 * i], k_convs[2 * i + 1]
        conv_ws.append(0.1 * jax.random.normal(kw, (Co, K, D), dtype=jnp.float32))
        conv_bs.append(0.1 * jax.random.normal(kb, (Co,), dtype=jnp.float32))

    in_features = len(Ks) * Co
    fc_w = 0.1 * jax.random.normal(k_fcw, (num_classes, in_features), dtype=jnp.float32)
    fc_b = 0.1 * jax.random.normal(k_fcb, (num_classes,), dtype=jnp.float32)

    logits = cnn_forward(tokens, embed_table, conv_ws, conv_bs, fc_w, fc_b, Ks)
    logits = jax.block_until_ready(logits)

    ref = cnn_reference(tokens, embed_table, conv_ws, conv_bs, fc_w, fc_b, Ks)
    assert logits.shape == (N, num_classes)
    # bf16 MXU inputs (f32 accumulation): loosened tolerance vs the f32 reference.
    assert jnp.allclose(logits, ref, atol=2e-2, rtol=2e-2), (logits, ref)

    print("KERNEL_OK")
</pallas_src>

<mosaic_0001>
module attributes {stable_mosaic.version = 11 : i64} {
  func.func @kernel(%arg0: i32, %arg1: memref<8x20x32xbf16, #tpu.memory_space<vmem>>, %arg2: memref<5x32x128xbf16, #tpu.memory_space<vmem>>, %arg3: memref<1x128xf32, #tpu.memory_space<vmem>>, %arg4: memref<128x128xf32, #tpu.memory_space<vmem>>, %arg5: memref<128x128xbf16, #tpu.memory_space<vmem>>, %arg6: memref<1x128xf32, #tpu.memory_space<vmem>>, %arg7: memref<8x128xf32, #tpu.memory_space<vmem>>) attributes {dimension_semantics = [#tpu.dimension_semantics<parallel>], iteration_bounds = array<i64: 1>, scalar_prefetch = 0 : i64, scratch_operands = 0 : i64, tpu.core_type = #tpu.core_type<tc>, window_params = [{transform_indices = @transform_0, window_bounds = array<i64: 8, 20, 32>}, {pipeline_mode = #tpu.pipeline_mode<synchronous>, transform_indices = @transform_1, window_bounds = array<i64: 5, 32, 128>}, {pipeline_mode = #tpu.pipeline_mode<synchronous>, transform_indices = @transform_2, window_bounds = array<i64: 1, 128>}, {pipeline_mode = #tpu.pipeline_mode<synchronous>, transform_indices = @transform_3, window_bounds = array<i64: 128, 128>}, {pipeline_mode = #tpu.pipeline_mode<synchronous>, transform_indices = @transform_4, window_bounds = array<i64: 128, 128>}, {pipeline_mode = #tpu.pipeline_mode<synchronous>, transform_indices = @transform_5, window_bounds = array<i64: 1, 128>}, {transform_indices = @transform_6, window_bounds = array<i64: 8, 128>}]} {
    %c0 = arith.constant 0 : index
    %c0_0 = arith.constant 0 : index
    %c0_1 = arith.constant 0 : index
    %0 = vector.load %arg1[%c0, %c0_0, %c0_1] : memref<8x20x32xbf16, #tpu.memory_space<vmem>>, vector<8x20x32xbf16>
    %c0_2 = arith.constant 0 : index
    %c0_3 = arith.constant 0 : index
    %c0_4 = arith.constant 0 : index
    %1 = vector.load %arg2[%c0_2, %c0_3, %c0_4] : memref<5x32x128xbf16, #tpu.memory_space<vmem>>, vector<5x32x128xbf16>
    %cst = arith.constant 0.000000e+00 : f32
    %2 = vector.broadcast %cst : f32 to vector<128x128xf32>
    %3 = vector.extract_strided_slice %0 {offsets = [0, 0, 0], sizes = [8, 16, 32], strides = [1, 1, 1]} : vector<8x20x32xbf16> to vector<8x16x32xbf16>
    %4 = vector.shape_cast %3 : vector<8x16x32xbf16> to vector<128x32xbf16>
    %5 = vector.extract_strided_slice %1 {offsets = [0, 0, 0], sizes = [1, 32, 128], strides = [1, 1, 1]} : vector<5x32x128xbf16> to vector<1x32x128xbf16>
    %6 = vector.shape_cast %5 : vector<1x32x128xbf16> to vector<32x128xbf16>
    %cst_5 = arith.constant dense<0.000000e+00> : vector<128x128xf32>
    %7 = tpu.matmul %4, %6, %cst_5 {dimension_numbers = #tpu.dot_dimension_numbers<[1], [0], [0], [1], [0, 0, 1, 1], [], []>} : vector<128x32xbf16>, vector<32x128xbf16>, vector<128x128xf32> -> vector<128x128xf32>
    %8 = arith.addf %2, %7 : vector<128x128xf32>
    %9 = vector.extract_strided_slice %0 {offsets = [0, 1, 0], sizes = [8, 16, 32], strides = [1, 1, 1]} : vector<8x20x32xbf16> to vector<8x16x32xbf16>
    %10 = vector.shape_cast %9 : vector<8x16x32xbf16> to vector<128x32xbf16>
    %11 = vector.extract_strided_slice %1 {offsets = [1, 0, 0], sizes = [1, 32, 128], strides = [1, 1, 1]} : vector<5x32x128xbf16> to vector<1x32x128xbf16>
    %12 = vector.shape_cast %11 : vector<1x32x128xbf16> to vector<32x128xbf16>
    %cst_6 = arith.constant dense<0.000000e+00> : vector<128x128xf32>
    %13 = tpu.matmul %10, %12, %cst_6 {dimension_numbers = #tpu.dot_dimension_numbers<[1], [0], [0], [1], [0, 0, 1, 1], [], []>} : vector<128x32xbf16>, vector<32x128xbf16>, vector<128x128xf32> -> vector<128x128xf32>
    %14 = arith.addf %8, %13 : vector<128x128xf32>
    %15 = vector.extract_strided_slice %0 {offsets = [0, 2, 0], sizes = [8, 16, 32], strides = [1, 1, 1]} : vector<8x20x32xbf16> to vector<8x16x32xbf16>
    %16 = vector.shape_cast %15 : vector<8x16x32xbf16> to vector<128x32xbf16>
    %17 = vector.extract_strided_slice %1 {offsets = [2, 0, 0], sizes = [1, 32, 128], strides = [1, 1, 1]} : vector<5x32x128xbf16> to vector<1x32x128xbf16>
    %18 = vector.shape_cast %17 : vector<1x32x128xbf16> to vector<32x128xbf16>
    %cst_7 = arith.constant dense<0.000000e+00> : vector<128x128xf32>
    %19 = tpu.matmul %16, %18, %cst_7 {dimension_numbers = #tpu.dot_dimension_numbers<[1], [0], [0], [1], [0, 0, 1, 1], [], []>} : vector<128x32xbf16>, vector<32x128xbf16>, vector<128x128xf32> -> vector<128x128xf32>
    %20 = arith.addf %14, %19 : vector<128x128xf32>
    %21 = vector.extract_strided_slice %0 {offsets = [0, 3, 0], sizes = [8, 16, 32], strides = [1, 1, 1]} : vector<8x20x32xbf16> to vector<8x16x32xbf16>
    %22 = vector.shape_cast %21 : vector<8x16x32xbf16> to vector<128x32xbf16>
    %23 = vector.extract_strided_slice %1 {offsets = [3, 0, 0], sizes = [1, 32, 128], strides = [1, 1, 1]} : vector<5x32x128xbf16> to vector<1x32x128xbf16>
    %24 = vector.shape_cast %23 : vector<1x32x128xbf16> to vector<32x128xbf16>
    %cst_8 = arith.constant dense<0.000000e+00> : vector<128x128xf32>
    %25 = tpu.matmul %22, %24, %cst_8 {dimension_numbers = #tpu.dot_dimension_numbers<[1], [0], [0], [1], [0, 0, 1, 1], [], []>} : vector<128x32xbf16>, vector<32x128xbf16>, vector<128x128xf32> -> vector<128x128xf32>
    %26 = arith.addf %20, %25 : vector<128x128xf32>
    %27 = vector.extract_strided_slice %0 {offsets = [0, 4, 0], sizes = [8, 16, 32], strides = [1, 1, 1]} : vector<8x20x32xbf16> to vector<8x16x32xbf16>
    %28 = vector.shape_cast %27 : vector<8x16x32xbf16> to vector<128x32xbf16>
    %29 = vector.extract_strided_slice %1 {offsets = [4, 0, 0], sizes = [1, 32, 128], strides = [1, 1, 1]} : vector<5x32x128xbf16> to vector<1x32x128xbf16>
    %30 = vector.shape_cast %29 : vector<1x32x128xbf16> to vector<32x128xbf16>
    %cst_9 = arith.constant dense<0.000000e+00> : vector<128x128xf32>
    %31 = tpu.matmul %28, %30, %cst_9 {dimension_numbers = #tpu.dot_dimension_numbers<[1], [0], [0], [1], [0, 0, 1, 1], [], []>} : vector<128x32xbf16>, vector<32x128xbf16>, vector<128x128xf32> -> vector<128x128xf32>
    %32 = arith.addf %26, %31 : vector<128x128xf32>
    %c0_10 = arith.constant 0 : index
    %c0_11 = arith.constant 0 : index
    %33 = vector.load %arg3[%c0_10, %c0_11] : memref<1x128xf32, #tpu.memory_space<vmem>>, vector<1x128xf32>
    %34 = vector.broadcast %33 : vector<1x128xf32> to vector<128x128xf32>
    %35 = arith.addf %32, %34 : vector<128x128xf32>
    %cst_12 = arith.constant 0.000000e+00 : f32
    %36 = vector.broadcast %cst_12 : f32 to vector<128x128xf32>
    %37 = arith.maximumf %35, %36 : vector<128x128xf32>
    %c0_13 = arith.constant 0 : index
    %c0_14 = arith.constant 0 : index
    %38 = vector.load %arg4[%c0_13, %c0_14] : memref<128x128xf32, #tpu.memory_space<vmem>>, vector<128x128xf32>
    %39 = arith.mulf %37, %38 : vector<128x128xf32>
    %40 = vector.shape_cast %39 : vector<128x128xf32> to vector<8x16x128xf32>
    %cst_15 = arith.constant dense<0xFF800000> : vector<8x128xf32>
    %41 = vector.multi_reduction <maximumf>, %40, %cst_15 [1] : vector<8x16x128xf32> to vector<8x128xf32>
    %42 = arith.truncf %41 : vector<8x128xf32> to vector<8x128xbf16>
    %c0_16 = arith.constant 0 : index
    %c0_17 = arith.constant 0 : index
    %43 = vector.load %arg5[%c0_16, %c0_17] : memref<128x128xbf16, #tpu.memory_space<vmem>>, vector<128x128xbf16>
    %cst_18 = arith.constant dense<0.000000e+00> : vector<8x128xf32>
    %44 = tpu.matmul %42, %43, %cst_18 {dimension_numbers = #tpu.dot_dimension_numbers<[1], [0], [0], [1], [0, 0, 1, 1], [], []>} : vector<8x128xbf16>, vector<128x128xbf16>, vector<8x128xf32> -> vector<8x128xf32>
    %c0_19 = arith.constant 0 : index
    %c0_20 = arith.constant 0 : index
    %45 = vector.load %arg6[%c0_19, %c0_20] : memref<1x128xf32, #tpu.memory_space<vmem>>, vector<1x128xf32>
    %46 = vector.broadcast %45 : vector<1x128xf32> to vector<8x128xf32>
    %47 = arith.addf %44, %46 : vector<8x128xf32>
    %c0_21 = arith.constant 0 : index
    %c0_22 = arith.constant 0 : index
    %48 = vector.load %arg7[%c0_21, %c0_22] : memref<8x128xf32, #tpu.memory_space<vmem>>, vector<8x128xf32>
    tpu.vector_store %arg7[%c0_21, %c0_22], %47 {strides = array<i32>} : memref<8x128xf32, #tpu.memory_space<vmem>>, vector<8x128xf32>,
    return
  }
  func.func @transform_0(%arg0: i32) -> (i32, i32, i32) {
    %c0_i32 = arith.constant 0 : i32
    %c0_i32_0 = arith.constant 0 : i32
    %c0_i32_1 = arith.constant 0 : i32
    return %arg0, %c0_i32, %c0_i32_0 : i32, i32, i32
  }
  func.func @transform_1(%arg0: i32) -> (i32, i32, i32) {
    %c0_i32 = arith.constant 0 : i32
    %c0_i32_0 = arith.constant 0 : i32
    %c0_i32_1 = arith.constant 0 : i32
    %c0_i32_2 = arith.constant 0 : i32
    return %c0_i32, %c0_i32_0, %c0_i32_1 : i32, i32, i32
  }
  func.func @transform_2(%arg0: i32) -> (i32, i32) {
    %c0_i32 = arith.constant 0 : i32
    %c0_i32_0 = arith.constant 0 : i32
    %c0_i32_1 = arith.constant 0 : i32
    return %c0_i32, %c0_i32_0 : i32, i32
  }
  func.func @transform_3(%arg0: i32) -> (i32, i32) {
    %c0_i32 = arith.constant 0 : i32
    %c0_i32_0 = arith.constant 0 : i32
    %c0_i32_1 = arith.constant 0 : i32
    return %c0_i32, %c0_i32_0 : i32, i32
  }
  func.func @transform_4(%arg0: i32) -> (i32, i32) {
    %c0_i32 = arith.constant 0 : i32
    %c0_i32_0 = arith.constant 0 : i32
    %c0_i32_1 = arith.constant 0 : i32
    return %c0_i32, %c0_i32_0 : i32, i32
  }
  func.func @transform_5(%arg0: i32) -> (i32, i32) {
    %c0_i32 = arith.constant 0 : i32
    %c0_i32_0 = arith.constant 0 : i32
    %c0_i32_1 = arith.constant 0 : i32
    return %c0_i32, %c0_i32_0 : i32, i32
  }
  func.func @transform_6(%arg0: i32) -> (i32, i32) {
    %c0_i32 = arith.constant 0 : i32
    %c0_i32_0 = arith.constant 0 : i32
    return %arg0, %c0_i32 : i32, i32
  }
}

</mosaic_0001>

<llo_original>
// kernel: tpu_custom_call.1
$region0: #{tpu_custom_call.1}
  #allocation0 [shape = 'u32[]', space=smem, size = 0x4, offset = 0x4, fixed_abs, tag = 'smem constant byte address 0x4 - core index']
  #allocation1 [shape = 'u32[72,128]{1,0:T(1,128)}', space=vmem, size = 0x9000, scoped, tag = 'internal scratch']
  %s0 = inlined_call_operand.vmem [shape: bf16[8,20,32], index: 0, kind: input, shape index: {}]
  %s1 = inlined_call_operand.hbm [shape: bf16[5,32,128], index: 1, kind: input, shape index: {}]
  %s2 = inlined_call_operand.vmem [shape: f32[1,128], index: 2, kind: input, shape index: {}]
  %s3 = inlined_call_operand.vmem [shape: f32[128,128], index: 3, kind: input, shape index: {}]
  %s4 = inlined_call_operand.hbm [shape: bf16[128,128], index: 4, kind: input, shape index: {}]
  %s5 = inlined_call_operand.vmem [shape: f32[1,128], index: 5, kind: input, shape index: {}]
  %s6 = inlined_call_operand.hbm [shape: f32[8,128], index: 6, kind: output, shape index: {}]
  %s7 = sld [smem:[#allocation0]]
  $region42: #{tpu_custom_call.1} parent=0
    _
  %s9 = ssub.s32 1, %s7
  %s10 = scalar_select 0, %s9, %s7
  $region1: #{tpu_custom_call.1} parent=0
    #allocation2 [shape = 'u8[40960]{0}', space=vmem, size = 0xa000, scoped, tag = 'input window, operand 1, single buffered']
    #allocation3 [shape = 's32[1]{0}', space=sflag, size = 0x4, scoped, tag = 'scoped memory for tpu_custom_call.1']
    #allocation4 [shape = 's32[1]{0}', space=sflag, size = 0x4, scoped, tag = 'scoped memory for tpu_custom_call.1']
    #allocation5 [shape = 'u8[32768]{0}', space=vmem, size = 0x8000, scoped, tag = 'input window, operand 4, single buffered']
    #allocation6 [shape = 's32[1]{0}', space=sflag, size = 0x4, scoped, tag = 'scoped memory for tpu_custom_call.1']
    #allocation7 [shape = 'u8[4096]{0}', space=vmem, size = 0x1000, scoped, tag = 'output window, operand 0, single buffered']
    %11 = vsyncpa [#allocation3], 0
    %12 = vsyncpa [#allocation6], 0
    %13 = vsyncpa [#allocation4], 0
    // Predicated region
    $region2: #{tpu_custom_call.1} parent=1 // pred_check
      _
    $region3: #{tpu_custom_call.1} parent=1 // pred_check_branch
      %15 = sbr.rel (0) target = $region5
    $region4: #{tpu_custom_call.1} parent=1 // pred_region
      _
    $region5: #{tpu_custom_call.1} parent=1 // pred_fallthru
      _
    // Predicated region
    $region6: #{tpu_custom_call.1} parent=1 // pred_check
      _
    $region7: #{tpu_custom_call.1} parent=1 // pred_check_branch
      %17 = sbr.rel (0) target = $region9
    $region8: #{tpu_custom_call.1} parent=1 // pred_region
      %19 = vsyncadd [#allocation3], 0
      %s20 = sshll.u32 %s1, 4
      %s21 = int_to_ptr.hbm [resolvable:$true] %s20
      %s22 = sshll.u32 [#allocation2], 4
      %s23 = int_to_ptr.vmem [resolvable:$true] %s22
      %28 = dma.hbm_to_vmem [thread:$0]  %s21, 1280, %s23, [#allocation3], 64, 64, 4
    $region9: #{tpu_custom_call.1} parent=1 // pred_fallthru
      _
    // Predicated region
    $region10: #{tpu_custom_call.1} parent=1 // pred_check
      _
    $region11: #{tpu_custom_call.1} parent=1 // pred_check_branch
      %30 = sbr.rel (0) target = $region13
    $region12: #{tpu_custom_call.1} parent=1 // pred_region
      _
    $region13: #{tpu_custom_call.1} parent=1 // pred_fallthru
      _
    // Predicated region
    $region14: #{tpu_custom_call.1} parent=1 // pred_check
      _
    $region15: #{tpu_custom_call.1} parent=1 // pred_check_branch
      %32 = sbr.rel (0) target = $region17
    $region16: #{tpu_custom_call.1} parent=1 // pred_region
      _
    $region17: #{tpu_custom_call.1} parent=1 // pred_fallthru
      _
    // Predicated region
    $region18: #{tpu_custom_call.1} parent=1 // pred_check
      _
    $region19: #{tpu_custom_call.1} parent=1 // pred_check_branch
      %34 = sbr.rel (0) target = $region21
    $region20: #{tpu_custom_call.1} parent=1 // pred_region
      %36 = vsyncadd [#allocation6], 0
      %s37 = sshll.u32 %s4, 4
      %s38 = int_to_ptr.hbm [resolvable:$true] %s37
      %s39 = sshll.u32 [#allocation5], 4
      %s40 = int_to_ptr.vmem [resolvable:$true] %s39
      %45 = dma.hbm_to_vmem [thread:$0]  %s38, 1024, %s40, [#allocation6], 64, 64, 4
    $region21: #{tpu_custom_call.1} parent=1 // pred_fallthru
      _
    // Predicated region
    $region22: #{tpu_custom_call.1} parent=1 // pred_check
      _
    $region23: #{tpu_custom_call.1} parent=1 // pred_check_branch
      %47 = sbr.rel (0) target = $region25
    $region24: #{tpu_custom_call.1} parent=1 // pred_region
      _
    $region25: #{tpu_custom_call.1} parent=1 // pred_fallthru
      _
    // Predicated region
    $region26: #{tpu_custom_call.1} parent=1 // pred_check
      _
    $region27: #{tpu_custom_call.1} parent=1 // pred_check_branch
      %49 = sbr.rel (0) target = $region29
    $region28: #{tpu_custom_call.1} parent=1 // pred_region
      %51 = dma.done [#allocation3], 1280
    $region29: #{tpu_custom_call.1} parent=1 // pred_fallthru
      _
    // Predicated region
    $region30: #{tpu_custom_call.1} parent=1 // pred_check
      _
    $region31: #{tpu_custom_call.1} parent=1 // pred_check_branch
      %53 = sbr.rel (0) target = $region33
    $region32: #{tpu_custom_call.1} parent=1 // pred_region
      %55 = dma.done [#allocation6], 1024
    $region33: #{tpu_custom_call.1} parent=1 // pred_fallthru
      _
    %v57 = vld [vmem:[%s0] sm:$0xf]
    %v58 = vld [vmem:[%s0 + $0x4] sm:$0xf]
    %v59 = vld [vmem:[%s0 + $0x8] sm:$0x3]
    %v60 = vld [vmem:[%s0 + $0xc] sm:$0xf]
    %v61 = vld [vmem:[%s0 + $0x10] sm:$0xf]
    %v62 = vld [vmem:[%s0 + $0x14] sm:$0x3]
    %v63 = vld [vmem:[%s0 + $0x18] sm:$0xf]
    %v64 = vld [vmem:[%s0 + $0x1c] sm:$0xf]
    %v65 = vld [vmem:[%s0 + $0x20] sm:$0x3]
    %v66 = vld [vmem:[%s0 + $0x24] sm:$0xf]
    %v67 = vld [vmem:[%s0 + $0x28] sm:$0xf]
    %v68 = vld [vmem:[%s0 + $0x2c] sm:$0x3]
    %v69 = vld [vmem:[%s0 + $0x30] sm:$0xf]
    %v70 = vld [vmem:[%s0 + $0x34] sm:$0xf]
    %v71 = vld [vmem:[%s0 + $0x38] sm:$0x3]
    %v72 = vld [vmem:[%s0 + $0x3c] sm:$0xf]
    %v73 = vld [vmem:[%s0 + $0x40] sm:$0xf]
    %v74 = vld [vmem:[%s0 + $0x44] sm:$0x3]
    %v75 = vld [vmem:[%s0 + $0x48] sm:$0xf]
    %v76 = vld [vmem:[%s0 + $0x4c] sm:$0xf]
    %v77 = vld [vmem:[%s0 + $0x50] sm:$0x3]
    %v78 = vld [vmem:[%s0 + $0x54] sm:$0xf]
    %v79 = vld [vmem:[%s0 + $0x58] sm:$0xf]
    %v80 = vld [vmem:[%s0 + $0x5c] sm:$0x3]
    %v81 = vld [vmem:[#allocation2] sm:$0xf]
    %v82 = vld [vmem:[#allocation2 + $0x4] sm:$0xf]
    %v83 = vld [vmem:[#allocation2 + $0x8] sm:$0xf]
    %v84 = vld [vmem:[#allocation2 + $0xc] sm:$0xf]
    %v85 = vld [vmem:[#allocation2 + $0x10] sm:$0xf]
    %v86 = vld [vmem:[#allocation2 + $0x14] sm:$0xf]
    %v87 = vld [vmem:[#allocation2 + $0x18] sm:$0xf]
    %v88 = vld [vmem:[#allocation2 + $0x1c] sm:$0xf]
    %v89 = vld [vmem:[#allocation2 + $0x20] sm:$0xf]
    %v90 = vld [vmem:[#allocation2 + $0x24] sm:$0xf]
    %v91 = vld [vmem:[#allocation2 + $0x28] sm:$0xf]
    %v92 = vld [vmem:[#allocation2 + $0x2c] sm:$0xf]
    %v93 = vld [vmem:[#allocation2 + $0x30] sm:$0xf]
    %v94 = vld [vmem:[#allocation2 + $0x34] sm:$0xf]
    %v95 = vld [vmem:[#allocation2 + $0x38] sm:$0xf]
    %v96 = vld [vmem:[#allocation2 + $0x3c] sm:$0xf]
    %v97 = vld [vmem:[#allocation2 + $0x40] sm:$0xf]
    %v98 = vld [vmem:[#allocation2 + $0x44] sm:$0xf]
    %v99 = vld [vmem:[#allocation2 + $0x48] sm:$0xf]
    %v100 = vld [vmem:[#allocation2 + $0x4c] sm:$0xf]
    %vm101 = vsmask.f32 3328
    %vm102 = vsmask.f32 7440
    %vm103 = vmor %vm101, %vm102
    %v105 = vshrl.u32 %v57, 16
    %v107 = vrot.slane %v105, 4
    %v108 = vshll.u32 %v57, 16
    %v110 = vrot.slane %v108, 5
    %v111 = vor.u32 %v107, %v110
    %v112 = vrot.slane %v111, 4
    %v114 = vshll.u32 %v58, 16
    %v116 = vrot.slane %v114, 5
    %v117 = vsel %vm103, %v112, %v116
    %v118 = vshrl.u32 %v58, 16
    %v120 = vrot.slane %v118, 4
    %v121 = vor.u32 %v120, %v116
    %v122 = vrot.slane %v121, 4
    %v124 = vshll.u32 %v59, 16
    %v126 = vrot.slane %v124, 5
    %v127 = vsel %vm103, %v122, %v126
    %v129 = vshrl.u32 %v60, 16
    %v131 = vrot.slane %v129, 4
    %v132 = vshll.u32 %v60, 16
    %v134 = vrot.slane %v132, 5
    %v135 = vor.u32 %v131, %v134
    %v136 = vrot.slane %v135, 4
    %v138 = vshll.u32 %v61, 16
    %v140 = vrot.slane %v138, 5
    %v141 = vsel %vm103, %v136, %v140
    %v142 = vshrl.u32 %v61, 16
    %v144 = vrot.slane %v142, 4
    %v145 = vor.u32 %v144, %v140
    %v146 = vrot.slane %v145, 4
    %v148 = vshll.u32 %v62, 16
    %v150 = vrot.slane %v148, 5
    %v151 = vsel %vm103, %v146, %v150
    %v153 = vshrl.u32 %v63, 16
    %v155 = vrot.slane %v153, 4
    %v156 = vshll.u32 %v63, 16
    %v158 = vrot.slane %v156, 5
    %v159 = vor.u32 %v155, %v158
    %v160 = vrot.slane %v159, 4
    %v162 = vshll.u32 %v64, 16
    %v164 = vrot.slane %v162, 5
    %v165 = vsel %vm103, %v160, %v164
    %v166 = vshrl.u32 %v64, 16
    %v168 = vrot.slane %v166, 4
    %v169 = vor.u32 %v168, %v164
    %v170 = vrot.slane %v169, 4
    %v172 = vshll.u32 %v65, 16
    %v174 = vrot.slane %v172, 5
    %v175 = vsel %vm103, %v170, %v174
    %v177 = vshrl.u32 %v66, 16
    %v179 = vrot.slane %v177, 4
    %v180 = vshll.u32 %v66, 16
    %v182 = vrot.slane %v180, 5
    %v183 = vor.u32 %v179, %v182
    %v184 = vrot.slane %v183, 4
    %v186 = vshll.u32 %v67, 16
    %v188 = vrot.slane %v186, 5
    %v189 = vsel %vm103, %v184, %v188
    %v190 = vshrl.u32 %v67, 16
    %v192 = vrot.slane %v190, 4
    %v193 = vor.u32 %v192, %v188
    %v194 = vrot.slane %v193, 4
    %v196 = vshll.u32 %v68, 16
    %v198 = vrot.slane %v196, 5
    %v199 = vsel %vm103, %v194, %v198
    %v201 = vshrl.u32 %v69, 16
    %v203 = vrot.slane %v201, 4
    %v204 = vshll.u32 %v69, 16
    %v206 = vrot.slane %v204, 5
    %v207 = vor.u32 %v203, %v206
    %v208 = vrot.slane %v207, 4
    %v210 = vshll.u32 %v70, 16
    %v212 = vrot.slane %v210, 5
    %v213 = vsel %vm103, %v208, %v212
    %v214 = vshrl.u32 %v70, 16
    %v216 = vrot.slane %v214, 4
    %v217 = vor.u32 %v216, %v212
    %v218 = vrot.slane %v217, 4
    %v220 = vshll.u32 %v71, 16
    %v222 = vrot.slane %v220, 5
    %v223 = vsel %vm103, %v218, %v222
    %v225 = vshrl.u32 %v72, 16
    %v227 = vrot.slane %v225, 4
    %v228 = vshll.u32 %v72, 16
    %v230 = vrot.slane %v228, 5
    %v231 = vor.u32 %v227, %v230
    %v232 = vrot.slane %v231, 4
    %v234 = vshll.u32 %v73, 16
    %v236 = vrot.slane %v234, 5
    %v237 = vsel %vm103, %v232, %v236
    %v238 = vshrl.u32 %v73, 16
    %v240 = vrot.slane %v238, 4
    %v241 = vor.u32 %v240, %v236
    %v242 = vrot.slane %v241, 4
    %v244 = vshll.u32 %v74, 16
    %v246 = vrot.slane %v244, 5
    %v247 = vsel %vm103, %v242, %v246
    %v249 = vshrl.u32 %v75, 16
    %v251 = vrot.slane %v249, 4
    %v252 = vshll.u32 %v75, 16
    %v254 = vrot.slane %v252, 5
    %v255 = vor.u32 %v251, %v254
    %v256 = vrot.slane %v255, 4
    %v258 = vshll.u32 %v76, 16
    %v260 = vrot.slane %v258, 5
    %v261 = vsel %vm103, %v256, %v260
    %v262 = vshrl.u32 %v76, 16
    %v264 = vrot.slane %v262, 4
    %v265 = vor.u32 %v264, %v260
    %v266 = vrot.slane %v265, 4
    %v268 = vshll.u32 %v77, 16
    %v270 = vrot.slane %v268, 5
    %v271 = vsel %vm103, %v266, %v270
    %v273 = vshrl.u32 %v78, 16
    %v275 = vrot.slane %v273, 4
    %v276 = vshll.u32 %v78, 16
    %v278 = vrot.slane %v276, 5
    %v279 = vor.u32 %v275, %v278
    %v280 = vrot.slane %v279, 4
    %v282 = vshll.u32 %v79, 16
    %v284 = vrot.slane %v282, 5
    %v285 = vsel %vm103, %v280, %v284
    %v286 = vshrl.u32 %v79, 16
    %v288 = vrot.slane %v286, 4
    %v289 = vor.u32 %v288, %v284
    %v290 = vrot.slane %v289, 4
    %v292 = vshll.u32 %v80, 16
    %v294 = vrot.slane %v292, 5
    %v295 = vsel %vm103, %v290, %v294
    %v296 = vunpack.c.l.b16 %v117
    %v297 = vunpack.c.l.b16 %v127
    %v298 = vunpack.c.l.b16 %v141
    %v299 = vunpack.c.l.b16 %v151
    %v300 = vunpack.c.l.b16 %v165
    %v301 = vunpack.c.l.b16 %v175
    %v302 = vunpack.c.l.b16 %v189
    %v303 = vunpack.c.l.b16 %v199
    %v304 = vunpack.c.l.b16 %v213
    %v305 = vunpack.c.l.b16 %v223
    %v306 = vunpack.c.l.b16 %v237
    %v307 = vunpack.c.l.b16 %v247
    %v308 = vunpack.c.l.b16 %v261
    %v309 = vunpack.c.l.b16 %v271
    %v310 = vunpack.c.l.b16 %v285
    %v311 = vunpack.c.l.b16 %v295
    %v312 = vpack.c.b16 %v297, %v296
    %v313 = vpack.c.b16 %v299, %v298
    %v314 = vpack.c.b16 %v301, %v300
    %v315 = vpack.c.b16 %v303, %v302
    %v316 = vpack.c.b16 %v305, %v304
    %v317 = vpack.c.b16 %v307, %v306
    %v318 = vpack.c.b16 %v309, %v308
    %v319 = vpack.c.b16 %v311, %v310
    %v324 = vunpack.c.l.b16 %v85
    %v325 = vunpack.c.l.b16 %v86
    %v326 = vunpack.c.l.b16 %v87
    %v327 = vunpack.c.l.b16 %v88
    %v328 = vpack.c.b16 %v325, %v324
    %v329 = vpack.c.b16 %v327, %v326
    %vm332 = vcmask 261120
    %v334 = vsel %vm332, %v312, 0
    %v337 = vsel %vm332, %v313, 0
    %v340 = vsel %vm332, %v314, 0
    %v343 = vsel %vm332, %v315, 0
    %v346 = vsel %vm332, %v316, 0
    %v349 = vsel %vm332, %v317, 0
    %v352 = vsel %vm332, %v318, 0
    %v355 = vsel %vm332, %v319, 0
    %357 = vmatpush.bf16.msra.mxu0 0
    %358 = vmatpush.bf16.msra.mxu0 0
    %359 = vmatpush.bf16.msra.mxu0 0
    %360 = vmatpush.bf16.msra.mxu0 0
    %361 = vmatpush.bf16.msra.mxu0 0
    %362 = vmatpush.bf16.msra.mxu0 0
    %363 = vmatpush.bf16.msra.mxu0 %v329
    %364 = vmatpush.bf16.msra.mxu0 %v328
    %365 = vmatmul.bf16.gmra.mxu0 %v334
    %v366 = vpop.f32.mrf.mxu0
    %v367 = vadd.f32 0.0, %v366
    %v368 = vpop.f32.mrf.mxu0
    %v369 = vadd.f32 0.0, %v368
    %370 = vmatmul.bf16.gmra.mxu0 %v337
    %v371 = vpop.f32.mrf.mxu0
    %v372 = vadd.f32 0.0, %v371
    %v373 = vpop.f32.mrf.mxu0
    %v374 = vadd.f32 0.0, %v373
    %375 = vmatmul.bf16.gmra.mxu0 %v340
    %v376 = vpop.f32.mrf.mxu0
    %v377 = vadd.f32 0.0, %v376
    %v378 = vpop.f32.mrf.mxu0
    %v379 = vadd.f32 0.0, %v378
    %380 = vmatmul.bf16.gmra.mxu0 %v343
    %v381 = vpop.f32.mrf.mxu0
    %v382 = vadd.f32 0.0, %v381
    %v383 = vpop.f32.mrf.mxu0
    %v384 = vadd.f32 0.0, %v383
    %385 = vmatmul.bf16.gmra.mxu0 %v346
    %v386 = vpop.f32.mrf.mxu0
    %v387 = vadd.f32 0.0, %v386
    %v388 = vpop.f32.mrf.mxu0
    %v389 = vadd.f32 0.0, %v388
    %390 = vmatmul.bf16.gmra.mxu0 %v349
    %v391 = vpop.f32.mrf.mxu0
    %v392 = vadd.f32 0.0, %v391
    %v393 = vpop.f32.mrf.mxu0
    %v394 = vadd.f32 0.0, %v393
    %395 = vmatmul.bf16.gmra.mxu0 %v352
    %v396 = vpop.f32.mrf.mxu0
    %v397 = vadd.f32 0.0, %v396
    %v398 = vpop.f32.mrf.mxu0
    %v399 = vadd.f32 0.0, %v398
    %400 = vmatmul.bf16.gmra.mxu0 %v355
    %v401 = vpop.f32.mrf.mxu0
    %v402 = vadd.f32 0.0, %v401
    %v403 = vpop.f32.mrf.mxu0
    %v404 = vadd.f32 0.0, %v403
    %405 = vdwg.mxu0
    %v422 = vunpack.c.l.b16 %v57
    %v423 = vunpack.c.l.b16 %v58
    %v424 = vunpack.c.l.b16 %v60
    %v425 = vunpack.c.l.b16 %v61
    %v426 = vunpack.c.l.b16 %v63
    %v427 = vunpack.c.l.b16 %v64
    %v428 = vunpack.c.l.b16 %v66
    %v429 = vunpack.c.l.b16 %v67
    %v430 = vunpack.c.l.b16 %v69
    %v431 = vunpack.c.l.b16 %v70
    %v432 = vunpack.c.l.b16 %v72
    %v433 = vunpack.c.l.b16 %v73
    %v434 = vunpack.c.l.b16 %v75
    %v435 = vunpack.c.l.b16 %v76
    %v436 = vunpack.c.l.b16 %v78
    %v437 = vunpack.c.l.b16 %v79
    %v438 = vpack.c.b16 %v423, %v422
    %v439 = vpack.c.b16 %v425, %v424
    %v440 = vpack.c.b16 %v427, %v426
    %v441 = vpack.c.b16 %v429, %v428
    %v442 = vpack.c.b16 %v431, %v430
    %v443 = vpack.c.b16 %v433, %v432
    %v444 = vpack.c.b16 %v435, %v434
    %v445 = vpack.c.b16 %v437, %v436
    %v450 = vunpack.c.l.b16 %v81
    %v451 = vunpack.c.l.b16 %v82
    %v452 = vunpack.c.l.b16 %v83
    %v453 = vunpack.c.l.b16 %v84
    %v454 = vpack.c.b16 %v451, %v450
    %v455 = vpack.c.b16 %v453, %v452
    %v459 = vsel %vm332, %v438, 0
    %v462 = vsel %vm332, %v439, 0
    %v465 = vsel %vm332, %v440, 0
    %v468 = vsel %vm332, %v441, 0
    %v471 = vsel %vm332, %v442, 0
    %v474 = vsel %vm332, %v443, 0
    %v477 = vsel %vm332, %v444, 0
    %v480 = vsel %vm332, %v445, 0
    %482 = vmatpush.bf16.msra.mxu0 0
    %483 = vmatpush.bf16.msra.mxu0 0
    %484 = vmatpush.bf16.msra.mxu0 0
    %485 = vmatpush.bf16.msra.mxu0 0
    %486 = vmatpush.bf16.msra.mxu0 0
    %487 = vmatpush.bf16.msra.mxu0 0
    %488 = vmatpush.bf16.msra.mxu0 %v455
    %489 = vmatpush.bf16.msra.mxu0 %v454
    %490 = vmatmul.bf16.gmra.mxu0 %v459
    %v491 = vpop.f32.mrf.mxu0
    %v492 = vadd.f32 %v367, %v491
    %v493 = vpop.f32.mrf.mxu0
    %v494 = vadd.f32 %v369, %v493
    %495 = vmatmul.bf16.gmra.mxu0 %v462
    %v496 = vpop.f32.mrf.mxu0
    %v497 = vadd.f32 %v372, %v496
    %v498 = vpop.f32.mrf.mxu0
    %v499 = vadd.f32 %v374, %v498
    %500 = vmatmul.bf16.gmra.mxu0 %v465
    %v501 = vpop.f32.mrf.mxu0
    %v502 = vadd.f32 %v377, %v501
    %v503 = vpop.f32.mrf.mxu0
    %v504 = vadd.f32 %v379, %v503
    %505 = vmatmul.bf16.gmra.mxu0 %v468
    %v506 = vpop.f32.mrf.mxu0
    %v507 = vadd.f32 %v382, %v506
    %v508 = vpop.f32.mrf.mxu0
    %v509 = vadd.f32 %v384, %v508
    %510 = vmatmul.bf16.gmra.mxu0 %v471
    %v511 = vpop.f32.mrf.mxu0
    %v512 = vadd.f32 %v387, %v511
    %v513 = vpop.f32.mrf.mxu0
    %v514 = vadd.f32 %v389, %v513
    %515 = vmatmul.bf16.gmra.mxu0 %v474
    %v516 = vpop.f32.mrf.mxu0
    %v517 = vadd.f32 %v392, %v516
    %v518 = vpop.f32.mrf.mxu0
    %v519 = vadd.f32 %v394, %v518
    %520 = vmatmul.bf16.gmra.mxu0 %v477
    %v521 = vpop.f32.mrf.mxu0
    %v522 = vadd.f32 %v397, %v521
    %v523 = vpop.f32.mrf.mxu0
    %v524 = vadd.f32 %v399, %v523
    %525 = vmatmul.bf16.gmra.mxu0 %v480
    %v526 = vpop.f32.mrf.mxu0
    %v527 = vadd.f32 %v402, %v526
    %v528 = vpop.f32.mrf.mxu0
    %v529 = vadd.f32 %v404, %v528
    %530 = vdwg.mxu0
    %vm539 = vcmask 1042432
    %vm540 = vcmask 1046532
    %vm541 = vmor %vm539, %vm540
    %v542 = vrot.slane %v57, 5
    %v543 = vrot.slane %v542, 4
    %v544 = vrot.slane %v58, 5
    %v545 = vsel %vm541, %v543, %v544
    %v546 = vrot.slane %v544, 4
    %v547 = vrot.slane %v59, 5
    %v548 = vsel %vm541, %v546, %v547
    %v549 = vrot.slane %v60, 5
    %v550 = vrot.slane %v549, 4
    %v551 = vrot.slane %v61, 5
    %v552 = vsel %vm541, %v550, %v551
    %v553 = vrot.slane %v551, 4
    %v554 = vrot.slane %v62, 5
    %v555 = vsel %vm541, %v553, %v554
    %v556 = vrot.slane %v63, 5
    %v557 = vrot.slane %v556, 4
    %v558 = vrot.slane %v64, 5
    %v559 = vsel %vm541, %v557, %v558
    %v560 = vrot.slane %v558, 4
    %v561 = vrot.slane %v65, 5
    %v562 = vsel %vm541, %v560, %v561
    %v563 = vrot.slane %v66, 5
    %v564 = vrot.slane %v563, 4
    %v565 = vrot.slane %v67, 5
    %v566 = vsel %vm541, %v564, %v565
    %v567 = vrot.slane %v565, 4
    %v568 = vrot.slane %v68, 5
    %v569 = vsel %vm541, %v567, %v568
    %v570 = vrot.slane %v69, 5
    %v571 = vrot.slane %v570, 4
    %v572 = vrot.slane %v70, 5
    %v573 = vsel %vm541, %v571, %v572
    %v574 = vrot.slane %v572, 4
    %v575 = vrot.slane %v71, 5
    %v576 = vsel %vm541, %v574, %v575
    %v577 = vrot.slane %v72, 5
    %v578 = vrot.slane %v577, 4
    %v579 = vrot.slane %v73, 5
    %v580 = vsel %vm541, %v578, %v579
    %v581 = vrot.slane %v579, 4
    %v582 = vrot.slane %v74, 5
    %v583 = vsel %vm541, %v581, %v582
    %v584 = vrot.slane %v75, 5
    %v585 = vrot.slane %v584, 4
    %v586 = vrot.slane %v76, 5
    %v587 = vsel %vm541, %v585, %v586
    %v588 = vrot.slane %v586, 4
    %v589 = vrot.slane %v77, 5
    %v590 = vsel %vm541, %v588, %v589
    %v591 = vrot.slane %v78, 5
    %v592 = vrot.slane %v591, 4
    %v593 = vrot.slane %v79, 5
    %v594 = vsel %vm541, %v592, %v593
    %v595 = vrot.slane %v593, 4
    %v596 = vrot.slane %v80, 5
    %v597 = vsel %vm541, %v595, %v596
    %v598 = vunpack.c.l.b16 %v545
    %v599 = vunpack.c.l.b16 %v548
    %v600 = vunpack.c.l.b16 %v552
    %v601 = vunpack.c.l.b16 %v555
    %v602 = vunpack.c.l.b16 %v559
    %v603 = vunpack.c.l.b16 %v562
    %v604 = vunpack.c.l.b16 %v566
    %v605 = vunpack.c.l.b16 %v569
    %v606 = vunpack.c.l.b16 %v573
    %v607 = vunpack.c.l.b16 %v576
    %v608 = vunpack.c.l.b16 %v580
    %v609 = vunpack.c.l.b16 %v583
    %v610 = vunpack.c.l.b16 %v587
    %v611 = vunpack.c.l.b16 %v590
    %v612 = vunpack.c.l.b16 %v594
    %v613 = vunpack.c.l.b16 %v597
    %v614 = vpack.c.b16 %v599, %v598
    %v615 = vpack.c.b16 %v601, %v600
    %v616 = vpack.c.b16 %v603, %v602
    %v617 = vpack.c.b16 %v605, %v604
    %v618 = vpack.c.b16 %v607, %v606
    %v619 = vpack.c.b16 %v609, %v608
    %v620 = vpack.c.b16 %v611, %v610
    %v621 = vpack.c.b16 %v613, %v612
    %v626 = vunpack.c.l.b16 %v89
    %v627 = vunpack.c.l.b16 %v90
    %v628 = vunpack.c.l.b16 %v91
    %v629 = vunpack.c.l.b16 %v92
    %v630 = vpack.c.b16 %v627, %v626
    %v631 = vpack.c.b16 %v629, %v628
    %v635 = vsel %vm332, %v614, 0
    %v638 = vsel %vm332, %v615, 0
    %v641 = vsel %vm332, %v616, 0
    %v644 = vsel %vm332, %v617, 0
    %v647 = vsel %vm332, %v618, 0
    %v650 = vsel %vm332, %v619, 0
    %v653 = vsel %vm332, %v620, 0
    %v656 = vsel %vm332, %v621, 0
    %658 = vmatpush.bf16.msra.mxu0 0
    %659 = vmatpush.bf16.msra.mxu0 0
    %660 = vmatpush.bf16.msra.mxu0 0
    %661 = vmatpush.bf16.msra.mxu0 0
    %662 = vmatpush.bf16.msra.mxu0 0
    %663 = vmatpush.bf16.msra.mxu0 0
    %664 = vmatpush.bf16.msra.mxu0 %v631
    %665 = vmatpush.bf16.msra.mxu0 %v630
    %666 = vmatmul.bf16.gmra.mxu0 %v635
    %v667 = vpop.f32.mrf.mxu0
    %v668 = vadd.f32 0.0, %v667
    %v669 = vpop.f32.mrf.mxu0
    %v670 = vadd.f32 0.0, %v669
    %671 = vmatmul.bf16.gmra.mxu0 %v638
    %v672 = vpop.f32.mrf.mxu0
    %v673 = vadd.f32 0.0, %v672
    %v674 = vpop.f32.mrf.mxu0
    %v675 = vadd.f32 0.0, %v674
    %676 = vmatmul.bf16.gmra.mxu0 %v641
    %v677 = vpop.f32.mrf.mxu0
    %v678 = vadd.f32 0.0, %v677
    %v679 = vpop.f32.mrf.mxu0
    %v680 = vadd.f32 0.0, %v679
    %681 = vmatmul.bf16.gmra.mxu0 %v644
    %v682 = vpop.f32.mrf.mxu0
    %v683 = vadd.f32 0.0, %v682
    %v684 = vpop.f32.mrf.mxu0
    %v685 = vadd.f32 0.0, %v684
    %686 = vmatmul.bf16.gmra.mxu0 %v647
    %v687 = vpop.f32.mrf.mxu0
    %v688 = vadd.f32 0.0, %v687
    %v689 = vpop.f32.mrf.mxu0
    %v690 = vadd.f32 0.0, %v689
    %691 = vmatmul.bf16.gmra.mxu0 %v650
    %v692 = vpop.f32.mrf.mxu0
    %v693 = vadd.f32 0.0, %v692
    %v694 = vpop.f32.mrf.mxu0
    %v695 = vadd.f32 0.0, %v694
    %696 = vmatmul.bf16.gmra.mxu0 %v653
    %v697 = vpop.f32.mrf.mxu0
    %v698 = vadd.f32 0.0, %v697
    %v699 = vpop.f32.mrf.mxu0
    %v700 = vadd.f32 0.0, %v699
    %701 = vmatmul.bf16.gmra.mxu0 %v656
    %v702 = vpop.f32.mrf.mxu0
    %v703 = vadd.f32 0.0, %v702
    %v704 = vpop.f32.mrf.mxu0
    %v705 = vadd.f32 0.0, %v704
    %706 = vdwg.mxu0
    %v707 = vadd.f32 %v492, %v668
    %v708 = vadd.f32 %v494, %v670
    %v709 = vadd.f32 %v497, %v673
    %v710 = vadd.f32 %v499, %v675
    %v711 = vadd.f32 %v502, %v678
    %v712 = vadd.f32 %v504, %v680
    %v713 = vadd.f32 %v507, %v683
    %v714 = vadd.f32 %v509, %v685
    %v715 = vadd.f32 %v512, %v688
    %v716 = vadd.f32 %v514, %v690
    %v717 = vadd.f32 %v517, %v693
    %v718 = vadd.f32 %v519, %v695
    %v719 = vadd.f32 %v522, %v698
    %v720 = vadd.f32 %v524, %v700
    %v721 = vadd.f32 %v527, %v703
    %v722 = vadd.f32 %v529, %v705
    %vm723 = vsmask.f32 2304
    %vm724 = vsmask.f32 6416
    %vm725 = vmor %vm723, %vm724
    %v726 = vrot.slane %v105, 5
    %v727 = vrot.slane %v108, 6
    %v728 = vor.u32 %v726, %v727
    %v729 = vrot.slane %v728, 4
    %v730 = vrot.slane %v118, 5
    %v731 = vrot.slane %v114, 6
    %v732 = vor.u32 %v730, %v731
    %v733 = vsel %vm725, %v729, %v732
    %v734 = vrot.slane %v732, 4
    %v735 = vshrl.u32 %v59, 16
    %v737 = vrot.slane %v735, 5
    %v738 = vrot.slane %v124, 6
    %v739 = vor.u32 %v737, %v738
    %v740 = vsel %vm725, %v734, %v739
    %v741 = vrot.slane %v129, 5
    %v742 = vrot.slane %v132, 6
    %v743 = vor.u32 %v741, %v742
    %v744 = vrot.slane %v743, 4
    %v745 = vrot.slane %v142, 5
    %v746 = vrot.slane %v138, 6
    %v747 = vor.u32 %v745, %v746
    %v748 = vsel %vm725, %v744, %v747
    %v749 = vrot.slane %v747, 4
    %v750 = vshrl.u32 %v62, 16
    %v752 = vrot.slane %v750, 5
    %v753 = vrot.slane %v148, 6
    %v754 = vor.u32 %v752, %v753
    %v755 = vsel %vm725, %v749, %v754
    %v756 = vrot.slane %v153, 5
    %v757 = vrot.slane %v156, 6
    %v758 = vor.u32 %v756, %v757
    %v759 = vrot.slane %v758, 4
    %v760 = vrot.slane %v166, 5
    %v761 = vrot.slane %v162, 6
    %v762 = vor.u32 %v760, %v761
    %v763 = vsel %vm725, %v759, %v762
    %v764 = vrot.slane %v762, 4
    %v765 = vshrl.u32 %v65, 16
    %v767 = vrot.slane %v765, 5
    %v768 = vrot.slane %v172, 6
    %v769 = vor.u32 %v767, %v768
    %v770 = vsel %vm725, %v764, %v769
    %v771 = vrot.slane %v177, 5
    %v772 = vrot.slane %v180, 6
    %v773 = vor.u32 %v771, %v772
    %v774 = vrot.slane %v773, 4
    %v775 = vrot.slane %v190, 5
    %v776 = vrot.slane %v186, 6
    %v777 = vor.u32 %v775, %v776
    %v778 = vsel %vm725, %v774, %v777
    %v779 = vrot.slane %v777, 4
    %v780 = vshrl.u32 %v68, 16
    %v782 = vrot.slane %v780, 5
    %v783 = vrot.slane %v196, 6
    %v784 = vor.u32 %v782, %v783
    %v785 = vsel %vm725, %v779, %v784
    %v786 = vrot.slane %v201, 5
    %v787 = vrot.slane %v204, 6
    %v788 = vor.u32 %v786, %v787
    %v789 = vrot.slane %v788, 4
    %v790 = vrot.slane %v214, 5
    %v791 = vrot.slane %v210, 6
    %v792 = vor.u32 %v790, %v791
    %v793 = vsel %vm725, %v789, %v792
    %v794 = vrot.slane %v792, 4
    %v795 = vshrl.u32 %v71, 16
    %v797 = vrot.slane %v795, 5
    %v798 = vrot.slane %v220, 6
    %v799 = vor.u32 %v797, %v798
    %v800 = vsel %vm725, %v794, %v799
    %v801 = vrot.slane %v225, 5
    %v802 = vrot.slane %v228, 6
    %v803 = vor.u32 %v801, %v802
    %v804 = vrot.slane %v803, 4
    %v805 = vrot.slane %v238, 5
    %v806 = vrot.slane %v234, 6
    %v807 = vor.u32 %v805, %v806
    %v808 = vsel %vm725, %v804, %v807
    %v809 = vrot.slane %v807, 4
    %v810 = vshrl.u32 %v74, 16
    %v812 = vrot.slane %v810, 5
    %v813 = vrot.slane %v244, 6
    %v814 = vor.u32 %v812, %v813
    %v815 = vsel %vm725, %v809, %v814
    %v816 = vrot.slane %v249, 5
    %v817 = vrot.slane %v252, 6
    %v818 = vor.u32 %v816, %v817
    %v819 = vrot.slane %v818, 4
    %v820 = vrot.slane %v262, 5
    %v821 = vrot.slane %v258, 6
    %v822 = vor.u32 %v820, %v821
    %v823 = vsel %vm725, %v819, %v822
    %v824 = vrot.slane %v822, 4
    %v825 = vshrl.u32 %v77, 16
    %v827 = vrot.slane %v825, 5
    %v828 = vrot.slane %v268, 6
    %v829 = vor.u32 %v827, %v828
    %v830 = vsel %vm725, %v824, %v829
    %v831 = vrot.slane %v273, 5
    %v832 = vrot.slane %v276, 6
    %v833 = vor.u32 %v831, %v832
    %v834 = vrot.slane %v833, 4
    %v835 = vrot.slane %v286, 5
    %v836 = vrot.slane %v282, 6
    %v837 = vor.u32 %v835, %v836
    %v838 = vsel %vm725, %v834, %v837
    %v839 = vrot.slane %v837, 4
    %v840 = vshrl.u32 %v80, 16
    %v842 = vrot.slane %v840, 5
    %v843 = vrot.slane %v292, 6
    %v844 = vor.u32 %v842, %v843
    %v845 = vsel %vm725, %v839, %v844
    %v846 = vunpack.c.l.b16 %v733
    %v847 = vunpack.c.l.b16 %v740
    %v848 = vunpack.c.l.b16 %v748
    %v849 = vunpack.c.l.b16 %v755
    %v850 = vunpack.c.l.b16 %v763
    %v851 = vunpack.c.l.b16 %v770
    %v852 = vunpack.c.l.b16 %v778
    %v853 = vunpack.c.l.b16 %v785
    %v854 = vunpack.c.l.b16 %v793
    %v855 = vunpack.c.l.b16 %v800
    %v856 = vunpack.c.l.b16 %v808
    %v857 = vunpack.c.l.b16 %v815
    %v858 = vunpack.c.l.b16 %v823
    %v859 = vunpack.c.l.b16 %v830
    %v860 = vunpack.c.l.b16 %v838
    %v861 = vunpack.c.l.b16 %v845
    %v862 = vpack.c.b16 %v847, %v846
    %v863 = vpack.c.b16 %v849, %v848
    %v864 = vpack.c.b16 %v851, %v850
    %v865 = vpack.c.b16 %v853, %v852
    %v866 = vpack.c.b16 %v855, %v854
    %v867 = vpack.c.b16 %v857, %v856
    %v868 = vpack.c.b16 %v859, %v858
    %v869 = vpack.c.b16 %v861, %v860
    %v874 = vunpack.c.l.b16 %v93
    %v875 = vunpack.c.l.b16 %v94
    %v876 = vunpack.c.l.b16 %v95
    %v877 = vunpack.c.l.b16 %v96
    %v878 = vpack.c.b16 %v875, %v874
    %v879 = vpack.c.b16 %v877, %v876
    %v883 = vsel %vm332, %v862, 0
    %v886 = vsel %vm332, %v863, 0
    %v889 = vsel %vm332, %v864, 0
    %v892 = vsel %vm332, %v865, 0
    %v895 = vsel %vm332, %v866, 0
    %v898 = vsel %vm332, %v867, 0
    %v901 = vsel %vm332, %v868, 0
    %v904 = vsel %vm332, %v869, 0
    %906 = vmatpush.bf16.msra.mxu0 0
    %907 = vmatpush.bf16.msra.mxu0 0
    %908 = vmatpush.bf16.msra.mxu0 0
    %909 = vmatpush.bf16.msra.mxu0 0
    %910 = vmatpush.bf16.msra.mxu0 0
    %911 = vmatpush.bf16.msra.mxu0 0
    %912 = vmatpush.bf16.msra.mxu0 %v879
    %913 = vmatpush.bf16.msra.mxu0 %v878
    %914 = vmatmul.bf16.gmra.mxu0 %v883
    %v915 = vpop.f32.mrf.mxu0
    %v916 = vadd.f32 0.0, %v915
    %v917 = vpop.f32.mrf.mxu0
    %v918 = vadd.f32 0.0, %v917
    %919 = vmatmul.bf16.gmra.mxu0 %v886
    %v920 = vpop.f32.mrf.mxu0
    %v921 = vadd.f32 0.0, %v920
    %v922 = vpop.f32.mrf.mxu0
    %v923 = vadd.f32 0.0, %v922
    %924 = vmatmul.bf16.gmra.mxu0 %v889
    %v925 = vpop.f32.mrf.mxu0
    %v926 = vadd.f32 0.0, %v925
    %v927 = vpop.f32.mrf.mxu0
    %v928 = vadd.f32 0.0, %v927
    %929 = vmatmul.bf16.gmra.mxu0 %v892
    %v930 = vpop.f32.mrf.mxu0
    %v931 = vadd.f32 0.0, %v930
    %v932 = vpop.f32.mrf.mxu0
    %v933 = vadd.f32 0.0, %v932
    %934 = vmatmul.bf16.gmra.mxu0 %v895
    %v935 = vpop.f32.mrf.mxu0
    %v936 = vadd.f32 0.0, %v935
    %v937 = vpop.f32.mrf.mxu0
    %v938 = vadd.f32 0.0, %v937
    %939 = vmatmul.bf16.gmra.mxu0 %v898
    %v940 = vpop.f32.mrf.mxu0
    %v941 = vadd.f32 0.0, %v940
    %v942 = vpop.f32.mrf.mxu0
    %v943 = vadd.f32 0.0, %v942
    %944 = vmatmul.bf16.gmra.mxu0 %v901
    %v945 = vpop.f32.mrf.mxu0
    %v946 = vadd.f32 0.0, %v945
    %v947 = vpop.f32.mrf.mxu0
    %v948 = vadd.f32 0.0, %v947
    %949 = vmatmul.bf16.gmra.mxu0 %v904
    %v950 = vpop.f32.mrf.mxu0
    %v951 = vadd.f32 0.0, %v950
    %v952 = vpop.f32.mrf.mxu0
    %v953 = vadd.f32 0.0, %v952
    %954 = vdwg.mxu0
    %v955 = vadd.f32 %v707, %v916
    %v956 = vadd.f32 %v708, %v918
    %v957 = vadd.f32 %v709, %v921
    %v958 = vadd.f32 %v710, %v923
    %v959 = vadd.f32 %v711, %v926
    %v960 = vadd.f32 %v712, %v928
    %v961 = vadd.f32 %v713, %v931
    %v962 = vadd.f32 %v714, %v933
    %v963 = vadd.f32 %v715, %v936
    %v964 = vadd.f32 %v716, %v938
    %v965 = vadd.f32 %v717, %v941
    %v966 = vadd.f32 %v718, %v943
    %v967 = vadd.f32 %v719, %v946
    %v968 = vadd.f32 %v720, %v948
    %v969 = vadd.f32 %v721, %v951
    %v970 = vadd.f32 %v722, %v953
    %vm971 = vcmask 1041408
    %vm972 = vcmask 1045508
    %vm973 = vmor %vm971, %vm972
    %v974 = vrot.slane %v57, 6
    %v975 = vrot.slane %v974, 4
    %v976 = vrot.slane %v58, 6
    %v977 = vsel %vm973, %v975, %v976
    %v978 = vrot.slane %v976, 4
    %v979 = vrot.slane %v59, 6
    %v980 = vsel %vm973, %v978, %v979
    %v981 = vrot.slane %v60, 6
    %v982 = vrot.slane %v981, 4
    %v983 = vrot.slane %v61, 6
    %v984 = vsel %vm973, %v982, %v983
    %v985 = vrot.slane %v983, 4
    %v986 = vrot.slane %v62, 6
    %v987 = vsel %vm973, %v985, %v986
    %v988 = vrot.slane %v63, 6
    %v989 = vrot.slane %v988, 4
    %v990 = vrot.slane %v64, 6
    %v991 = vsel %vm973, %v989, %v990
    %v992 = vrot.slane %v990, 4
    %v993 = vrot.slane %v65, 6
    %v994 = vsel %vm973, %v992, %v993
    %v995 = vrot.slane %v66, 6
    %v996 = vrot.slane %v995, 4
    %v997 = vrot.slane %v67, 6
    %v998 = vsel %vm973, %v996, %v997
    %v999 = vrot.slane %v997, 4
    %v1000 = vrot.slane %v68, 6
    %v1001 = vsel %vm973, %v999, %v1000
    %v1002 = vrot.slane %v69, 6
    %v1003 = vrot.slane %v1002, 4
    %v1004 = vrot.slane %v70, 6
    %v1005 = vsel %vm973, %v1003, %v1004
    %v1006 = vrot.slane %v1004, 4
    %v1007 = vrot.slane %v71, 6
    %v1008 = vsel %vm973, %v1006, %v1007
    %v1009 = vrot.slane %v72, 6
    %v1010 = vrot.slane %v1009, 4
    %v1011 = vrot.slane %v73, 6
    %v1012 = vsel %vm973, %v1010, %v1011
    %v1013 = vrot.slane %v1011, 4
    %v1014 = vrot.slane %v74, 6
    %v1015 = vsel %vm973, %v1013, %v1014
    %v1016 = vrot.slane %v75, 6
    %v1017 = vrot.slane %v1016, 4
    %v1018 = vrot.slane %v76, 6
    %v1019 = vsel %vm973, %v1017, %v1018
    %v1020 = vrot.slane %v1018, 4
    %v1021 = vrot.slane %v77, 6
    %v1022 = vsel %vm973, %v1020, %v1021
    %v1023 = vrot.slane %v78, 6
    %v1024 = vrot.slane %v1023, 4
    %v1025 = vrot.slane %v79, 6
    %v1026 = vsel %vm973, %v1024, %v1025
    %v1027 = vrot.slane %v1025, 4
    %v1028 = vrot.slane %v80, 6
    %v1029 = vsel %vm973, %v1027, %v1028
    %v1030 = vunpack.c.l.b16 %v977
    %v1031 = vunpack.c.l.b16 %v980
    %v1032 = vunpack.c.l.b16 %v984
    %v1033 = vunpack.c.l.b16 %v987
    %v1034 = vunpack.c.l.b16 %v991
    %v1035 = vunpack.c.l.b16 %v994
    %v1036 = vunpack.c.l.b16 %v998
    %v1037 = vunpack.c.l.b16 %v1001
    %v1038 = vunpack.c.l.b16 %v1005
    %v1039 = vunpack.c.l.b16 %v1008
    %v1040 = vunpack.c.l.b16 %v1012
    %v1041 = vunpack.c.l.b16 %v1015
    %v1042 = vunpack.c.l.b16 %v1019
    %v1043 = vunpack.c.l.b16 %v1022
    %v1044 = vunpack.c.l.b16 %v1026
    %v1045 = vunpack.c.l.b16 %v1029
    %v1046 = vpack.c.b16 %v1031, %v1030
    %v1047 = vpack.c.b16 %v1033, %v1032
    %v1048 = vpack.c.b16 %v1035, %v1034
    %v1049 = vpack.c.b16 %v1037, %v1036
    %v1050 = vpack.c.b16 %v1039, %v1038
    %v1051 = vpack.c.b16 %v1041, %v1040
    %v1052 = vpack.c.b16 %v1043, %v1042
    %v1053 = vpack.c.b16 %v1045, %v1044
    %v1058 = vunpack.c.l.b16 %v97
    %v1059 = vunpack.c.l.b16 %v98
    %v1060 = vunpack.c.l.b16 %v99
    %v1061 = vunpack.c.l.b16 %v100
    %v1062 = vpack.c.b16 %v1059, %v1058
    %v1063 = vpack.c.b16 %v1061, %v1060
    %v1067 = vsel %vm332, %v1046, 0
    %v1070 = vsel %vm332, %v1047, 0
    %v1073 = vsel %vm332, %v1048, 0
    %v1076 = vsel %vm332, %v1049, 0
    %v1079 = vsel %vm332, %v1050, 0
    %v1082 = vsel %vm332, %v1051, 0
    %v1085 = vsel %vm332, %v1052, 0
    %v1088 = vsel %vm332, %v1053, 0
    %1090 = vmatpush.bf16.msra.mxu0 0
    %1091 = vmatpush.bf16.msra.mxu0 0
    %1092 = vmatpush.bf16.msra.mxu0 0
    %1093 = vmatpush.bf16.msra.mxu0 0
    %1094 = vmatpush.bf16.msra.mxu0 0
    %1095 = vmatpush.bf16.msra.mxu0 0
    %1096 = vmatpush.bf16.msra.mxu0 %v1063
    %1097 = vmatpush.bf16.msra.mxu0 %v1062
    %1098 = vmatmul.bf16.gmra.mxu0 %v1067
    %v1099 = vpop.f32.mrf.mxu0
    %v1100 = vadd.f32 0.0, %v1099
    %v1101 = vpop.f32.mrf.mxu0
    %v1102 = vadd.f32 0.0, %v1101
    %1103 = vmatmul.bf16.gmra.mxu0 %v1070
    %v1104 = vpop.f32.mrf.mxu0
    %v1105 = vadd.f32 0.0, %v1104
    %v1106 = vpop.f32.mrf.mxu0
    %v1107 = vadd.f32 0.0, %v1106
    %1108 = vmatmul.bf16.gmra.mxu0 %v1073
    %v1109 = vpop.f32.mrf.mxu0
    %v1110 = vadd.f32 0.0, %v1109
    %v1111 = vpop.f32.mrf.mxu0
    %v1112 = vadd.f32 0.0, %v1111
    %1113 = vmatmul.bf16.gmra.mxu0 %v1076
    %v1114 = vpop.f32.mrf.mxu0
    %v1115 = vadd.f32 0.0, %v1114
    %v1116 = vpop.f32.mrf.mxu0
    %v1117 = vadd.f32 0.0, %v1116
    %1118 = vmatmul.bf16.gmra.mxu0 %v1079
    %v1119 = vpop.f32.mrf.mxu0
    %v1120 = vadd.f32 0.0, %v1119
    %v1121 = vpop.f32.mrf.mxu0
    %v1122 = vadd.f32 0.0, %v1121
    %1123 = vmatmul.bf16.gmra.mxu0 %v1082
    %v1124 = vpop.f32.mrf.mxu0
    %v1125 = vadd.f32 0.0, %v1124
    %v1126 = vpop.f32.mrf.mxu0
    %v1127 = vadd.f32 0.0, %v1126
    %1128 = vmatmul.bf16.gmra.mxu0 %v1085
    %v1129 = vpop.f32.mrf.mxu0
    %v1130 = vadd.f32 0.0, %v1129
    %v1131 = vpop.f32.mrf.mxu0
    %v1132 = vadd.f32 0.0, %v1131
    %1133 = vmatmul.bf16.gmra.mxu0 %v1088
    %v1134 = vpop.f32.mrf.mxu0
    %v1135 = vadd.f32 0.0, %v1134
    %v1136 = vpop.f32.mrf.mxu0
    %v1137 = vadd.f32 0.0, %v1136
    %1138 = vdwg.mxu0
    %v1139 = vadd.f32 %v955, %v1100
    %v1140 = vadd.f32 %v956, %v1102
    %v1141 = vadd.f32 %v957, %v1105
    %v1142 = vadd.f32 %v958, %v1107
    %v1143 = vadd.f32 %v959, %v1110
    %v1144 = vadd.f32 %v960, %v1112
    %v1145 = vadd.f32 %v961, %v1115
    %v1146 = vadd.f32 %v962, %v1117
    %v1147 = vadd.f32 %v963, %v1120
    %v1148 = vadd.f32 %v964, %v1122
    %v1149 = vadd.f32 %v965, %v1125
    %v1150 = vadd.f32 %v966, %v1127
    %v1151 = vadd.f32 %v967, %v1130
    %v1152 = vadd.f32 %v968, %v1132
    %v1153 = vadd.f32 %v969, %v1135
    %v1154 = vadd.f32 %v970, %v1137
    %v1155 = vld [vmem:[%s2] sm:$0x1]
    %v1157 = vperm.slane %v1155, 0
    %v1159 = vadd.f32 %v1139, %v1157
    %v1160 = vadd.f32 %v1140, %v1157
    %v1161 = vadd.f32 %v1141, %v1157
    %v1162 = vadd.f32 %v1142, %v1157
    %v1163 = vadd.f32 %v1143, %v1157
    %v1164 = vadd.f32 %v1144, %v1157
    %v1165 = vadd.f32 %v1145, %v1157
    %v1166 = vadd.f32 %v1146, %v1157
    %v1167 = vadd.f32 %v1147, %v1157
    %v1168 = vadd.f32 %v1148, %v1157
    %v1169 = vadd.f32 %v1149, %v1157
    %v1170 = vadd.f32 %v1150, %v1157
    %v1171 = vadd.f32 %v1151, %v1157
    %v1172 = vadd.f32 %v1152, %v1157
    %v1173 = vadd.f32 %v1153, %v1157
    %v1174 = vadd.f32 %v1154, %v1157
    %v1175 = vmax.f32 %v1159, 0.0
    %v1176 = vmax.f32 %v1160, 0.0
    %v1177 = vmax.f32 %v1161, 0.0
    %v1178 = vmax.f32 %v1162, 0.0
    %v1179 = vmax.f32 %v1163, 0.0
    %v1180 = vmax.f32 %v1164, 0.0
    %v1181 = vmax.f32 %v1165, 0.0
    %v1182 = vmax.f32 %v1166, 0.0
    %v1183 = vmax.f32 %v1167, 0.0
    %v1184 = vmax.f32 %v1168, 0.0
    %v1185 = vmax.f32 %v1169, 0.0
    %v1186 = vmax.f32 %v1170, 0.0
    %v1187 = vmax.f32 %v1171, 0.0
    %v1188 = vmax.f32 %v1172, 0.0
    %v1189 = vmax.f32 %v1173, 0.0
    %v1190 = vmax.f32 %v1174, 0.0
    %v1191 = vld [vmem:[%s3] sm:$0xff]
    %v1192 = vld [vmem:[%s3 + $0x8] sm:$0xff]
    %v1193 = vld [vmem:[%s3 + $0x10] sm:$0xff]
    %v1194 = vld [vmem:[%s3 + $0x18] sm:$0xff]
    %v1195 = vld [vmem:[%s3 + $0x20] sm:$0xff]
    %v1196 = vld [vmem:[%s3 + $0x28] sm:$0xff]
    %v1197 = vld [vmem:[%s3 + $0x30] sm:$0xff]
    %v1198 = vld [vmem:[%s3 + $0x38] sm:$0xff]
    %v1199 = vld [vmem:[%s3 + $0x40] sm:$0xff]
    %v1200 = vld [vmem:[%s3 + $0x48] sm:$0xff]
    %v1201 = vld [vmem:[%s3 + $0x50] sm:$0xff]
    %v1202 = vld [vmem:[%s3 + $0x58] sm:$0xff]
    %v1203 = vld [vmem:[%s3 + $0x60] sm:$0xff]
    %v1204 = vld [vmem:[%s3 + $0x68] sm:$0xff]
    %v1205 = vld [vmem:[%s3 + $0x70] sm:$0xff]
    %v1206 = vld [vmem:[%s3 + $0x78] sm:$0xff]
    %v1207 = vmul.f32 %v1175, %v1191
    %v1208 = vmul.f32 %v1176, %v1192
    %v1209 = vmul.f32 %v1177, %v1193
    %v1210 = vmul.f32 %v1178, %v1194
    %v1211 = vmul.f32 %v1179, %v1195
    %v1212 = vmul.f32 %v1180, %v1196
    %v1213 = vmul.f32 %v1181, %v1197
    %v1214 = vmul.f32 %v1182, %v1198
    %v1215 = vmul.f32 %v1183, %v1199
    %v1216 = vmul.f32 %v1184, %v1200
    %v1217 = vmul.f32 %v1185, %v1201
    %v1218 = vmul.f32 %v1186, %v1202
    %v1219 = vmul.f32 %v1187, %v1203
    %v1220 = vmul.f32 %v1188, %v1204
    %v1221 = vmul.f32 %v1189, %v1205
    %v1222 = vmul.f32 %v1190, %v1206
    %v1223 = vmax.f32 %v1207, %v1208
    %v1224 = vrot.slane %v1223, 4
    %v1225 = vmax.f32 %v1223, %v1224
    %v1226 = vrot.slane %v1225, 2
    %v1227 = vmax.f32 %v1225, %v1226
    %v1228 = vrot.slane %v1227, 1
    %v1229 = vmax.f32 %v1227, %v1228
    %v1230 = vmax.f32 %v1209, %v1210
    %v1231 = vrot.slane %v1230, 4
    %v1232 = vmax.f32 %v1230, %v1231
    %v1233 = vrot.slane %v1232, 2
    %v1234 = vmax.f32 %v1232, %v1233
    %v1235 = vrot.slane %v1234, 1
    %v1236 = vmax.f32 %v1234, %v1235
    %v1237 = vmax.f32 %v1211, %v1212
    %v1238 = vrot.slane %v1237, 4
    %v1239 = vmax.f32 %v1237, %v1238
    %v1240 = vrot.slane %v1239, 2
    %v1241 = vmax.f32 %v1239, %v1240
    %v1242 = vrot.slane %v1241, 1
    %v1243 = vmax.f32 %v1241, %v1242
    %v1244 = vmax.f32 %v1213, %v1214
    %v1245 = vrot.slane %v1244, 4
    %v1246 = vmax.f32 %v1244, %v1245
    %v1247 = vrot.slane %v1246, 2
    %v1248 = vmax.f32 %v1246, %v1247
    %v1249 = vrot.slane %v1248, 1
    %v1250 = vmax.f32 %v1248, %v1249
    %v1251 = vmax.f32 %v1215, %v1216
    %v1252 = vrot.slane %v1251, 4
    %v1253 = vmax.f32 %v1251, %v1252
    %v1254 = vrot.slane %v1253, 2
    %v1255 = vmax.f32 %v1253, %v1254
    %v1256 = vrot.slane %v1255, 1
    %v1257 = vmax.f32 %v1255, %v1256
    %v1258 = vmax.f32 %v1217, %v1218
    %v1259 = vrot.slane %v1258, 4
    %v1260 = vmax.f32 %v1258, %v1259
    %v1261 = vrot.slane %v1260, 2
    %v1262 = vmax.f32 %v1260, %v1261
    %v1263 = vrot.slane %v1262, 1
    %v1264 = vmax.f32 %v1262, %v1263
    %v1265 = vmax.f32 %v1219, %v1220
    %v1266 = vrot.slane %v1265, 4
    %v1267 = vmax.f32 %v1265, %v1266
    %v1268 = vrot.slane %v1267, 2
    %v1269 = vmax.f32 %v1267, %v1268
    %v1270 = vrot.slane %v1269, 1
    %v1271 = vmax.f32 %v1269, %v1270
    %v1272 = vmax.f32 %v1221, %v1222
    %v1273 = vrot.slane %v1272, 4
    %v1274 = vmax.f32 %v1272, %v1273
    %v1275 = vrot.slane %v1274, 2
    %v1276 = vmax.f32 %v1274, %v1275
    %v1277 = vrot.slane %v1276, 1
    %v1278 = vmax.f32 %v1276, %v1277
    %v1279 = vpack.c.bf16 %v1229, %v1229
    %v1280 = vpack.c.bf16 %v1236, %v1236
    %v1281 = vpack.c.bf16 %v1243, %v1243
    %v1282 = vpack.c.bf16 %v1250, %v1250
    %v1283 = vpack.c.bf16 %v1257, %v1257
    %v1284 = vpack.c.bf16 %v1264, %v1264
    %v1285 = vpack.c.bf16 %v1271, %v1271
    %v1286 = vpack.c.bf16 %v1278, %v1278
    %v1287 = vld [vmem:[#allocation5] sm:$0xf]
    %v1288 = vld [vmem:[#allocation5 + $0x4] sm:$0xf]
    %v1289 = vld [vmem:[#allocation5 + $0x8] sm:$0xf]
    %v1290 = vld [vmem:[#allocation5 + $0xc] sm:$0xf]
    %v1291 = vld [vmem:[#allocation5 + $0x10] sm:$0xf]
    %v1292 = vld [vmem:[#allocation5 + $0x14] sm:$0xf]
    %v1293 = vld [vmem:[#allocation5 + $0x18] sm:$0xf]
    %v1294 = vld [vmem:[#allocation5 + $0x1c] sm:$0xf]
    %v1295 = vld [vmem:[#allocation5 + $0x20] sm:$0xf]
    %v1296 = vld [vmem:[#allocation5 + $0x24] sm:$0xf]
    %v1297 = vld [vmem:[#allocation5 + $0x28] sm:$0xf]
    %v1298 = vld [vmem:[#allocation5 + $0x2c] sm:$0xf]
    %v1299 = vld [vmem:[#allocation5 + $0x30] sm:$0xf]
    %v1300 = vld [vmem:[#allocation5 + $0x34] sm:$0xf]
    %v1301 = vld [vmem:[#allocation5 + $0x38] sm:$0xf]
    %v1302 = vld [vmem:[#allocation5 + $0x3c] sm:$0xf]
    %v1303 = vld [vmem:[%s5] sm:$0x1]
    %v1305 = vperm.slane %v1303, 0
    %v1315 = vunpack.c.l.b16 %v1279
    %v1316 = vunpack.c.l.b16 %v1280
    %v1317 = vunpack.c.l.b16 %v1281
    %v1318 = vunpack.c.l.b16 %v1282
    %v1319 = vunpack.c.l.b16 %v1283
    %v1320 = vunpack.c.l.b16 %v1284
    %v1321 = vunpack.c.l.b16 %v1285
    %v1322 = vunpack.c.l.b16 %v1286
    %vm1323 = vcmask 1041409
    %v1324 = vsel %vm1323, %v1316, %v1315
    %vm1325 = vcmask 1042434
    %v1326 = vsel %vm1325, %v1317, %v1324
    %vm1327 = vcmask 1043459
    %v1328 = vsel %vm1327, %v1318, %v1326
    %vm1329 = vcmask 1044484
    %v1330 = vsel %vm1329, %v1319, %v1328
    %vm1331 = vcmask 1045509
    %v1332 = vsel %vm1331, %v1320, %v1330
    %vm1333 = vcmask 1046534
    %v1334 = vsel %vm1333, %v1321, %v1332
    %vm1335 = vcmask 1047559
    %v1336 = vsel %vm1335, %v1322, %v1334
    %v1337 = vpack.c.b16 %v1336, %v1336
    %v1355 = vunpack.c.l.b16 %v1287
    %v1356 = vunpack.c.l.b16 %v1288
    %v1357 = vunpack.c.l.b16 %v1289
    %v1358 = vunpack.c.l.b16 %v1290
    %v1359 = vunpack.c.l.b16 %v1291
    %v1360 = vunpack.c.l.b16 %v1292
    %v1361 = vunpack.c.l.b16 %v1293
    %v1362 = vunpack.c.l.b16 %v1294
    %v1363 = vunpack.c.l.b16 %v1295
    %v1364 = vunpack.c.l.b16 %v1296
    %v1365 = vunpack.c.l.b16 %v1297
    %v1366 = vunpack.c.l.b16 %v1298
    %v1367 = vunpack.c.l.b16 %v1299
    %v1368 = vunpack.c.l.b16 %v1300
    %v1369 = vunpack.c.l.b16 %v1301
    %v1370 = vunpack.c.l.b16 %v1302
    %v1371 = vpack.c.b16 %v1356, %v1355
    %v1372 = vpack.c.b16 %v1358, %v1357
    %v1373 = vpack.c.b16 %v1360, %v1359
    %v1374 = vpack.c.b16 %v1362, %v1361
    %v1375 = vpack.c.b16 %v1364, %v1363
    %v1376 = vpack.c.b16 %v1366, %v1365
    %v1377 = vpack.c.b16 %v1368, %v1367
    %v1378 = vpack.c.b16 %v1370, %v1369
    %1387 = vmatpush.bf16.msra.mxu0 %v1378
    %1388 = vmatpush.bf16.msra.mxu0 %v1377
    %1389 = vmatpush.bf16.msra.mxu0 %v1376
    %1390 = vmatpush.bf16.msra.mxu0 %v1375
    %1391 = vmatpush.bf16.msra.mxu0 %v1374
    %1392 = vmatpush.bf16.msra.mxu0 %v1373
    %1393 = vmatpush.bf16.msra.mxu0 %v1372
    %1394 = vmatpush.bf16.msra.mxu0 %v1371
    %1395 = vmatmul.bf16.gmra.mxu0 %v1337
    %v1396 = vpop.f32.mrf.mxu0
    %v1397 = vadd.f32 %v1305, %v1396
    %v1398 = vpop.f32.mrf.mxu0
    %1399 = vdwg.mxu0
    %1400 = vst [vmem:[#allocation7] sm:$0xff] %v1397
    // Predicated region
    $region34: #{tpu_custom_call.1} parent=1 // pred_check
      _
    $region35: #{tpu_custom_call.1} parent=1 // pred_check_branch
      %1402 = sbr.rel (0) target = $region37
    $region36: #{tpu_custom_call.1} parent=1 // pred_region
      %1404 = vsyncadd [#allocation4], 0
      %s1406 = sshll.u32 [#allocation7], 4
      %s1407 = int_to_ptr.vmem [resolvable:$true] %s1406
      %s1408 = sshll.u32 %s6, 4
      %s1409 = int_to_ptr.hbm [resolvable:$true] %s1408
      %1411 = dma.vmem_to_hbm [thread:$0]  %s1407, 128, %s1409, [#allocation4]
    $region37: #{tpu_custom_call.1} parent=1 // pred_fallthru
      _
    // Predicated region
    $region38: #{tpu_custom_call.1} parent=1 // pred_check
      _
    $region39: #{tpu_custom_call.1} parent=1 // pred_check_branch
      %1413 = sbr.rel (0) target = $region41
    $region40: #{tpu_custom_call.1} parent=1 // pred_region
      %1415 = dma.done [#allocation4], 128
    $region41: #{tpu_custom_call.1} parent=1 // pred_fallthru
      _
    %1416 = vsyncpa [#allocation3], 1
    %1417 = vsyncpa [#allocation6], 1
    %1418 = vsyncpa [#allocation4], 1

</llo_original>
